<compile_context>
chip_gen: v7x
topology: tpu7x:2x2x1
jax: 0.10.0
libtpu: 0.0.40
codegen_flags: <defaults>
</compile_context>

<pallas_src>
import functools

import jax
import jax.numpy as jnp
from jax.experimental import pallas as pl
from jax.experimental.pallas import tpu as pltpu

_LN_EPS = 1e-5   # torch.nn.LayerNorm default
_LANE = 128
_ROW_ALIGN = 16  # bf16 sublane packing: keep row tiles multiples of 16


def _round_up(v, m):
    return (v + m - 1) // m * m


def _vmem_capacity_bytes():
    """Physical VMEM per TensorCore; conservative 64 MiB fallback (v7x)."""
    try:
        info = pltpu.get_tpu_info()
        cap = getattr(info, "vmem_capacity_bytes", None)
        if cap:
            return int(cap)
    except Exception:
        pass
    return 64 << 20


def _fused_encoder_kernel(*refs, layer_dims, activate_final):
    """Fused (Linear -> LayerNorm -> SiLU)* -> Linear over one row tile.

    refs layout:
      refs[0]                     x tile (TR, in_pad0)               bf16
      refs[1 + 2*i], refs[2+2*i]  layer i: W (in_pad, out_pad) bf16,
                                  packed bias/gamma/beta (3, out_pad) f32
      refs[1 + 2*L]               output tile (TR, out_pad_last)     f32
      refs[2 + 2*L], refs[3+2*L]  ping-pong VMEM activation scratch (TR, max_pad) bf16
    """
    n_layers = len(layer_dims)
    x_ref = refs[0]
    param_refs = refs[1:1 + 2 * n_layers]
    o_ref = refs[1 + 2 * n_layers]
    h_refs = (refs[2 + 2 * n_layers], refs[3 + 2 * n_layers])

    for li in range(n_layers):  # static unroll: layer count / shapes are compile-time
        w_ref, bgb_ref = param_refs[2 * li], param_refs[2 * li + 1]
        in_true, out_true, in_pad, out_pad = layer_dims[li]
        is_last = li == n_layers - 1

        # Layer input is already bf16 (x tile from HBM, or the bf16 ping-pong scratch).
        if li == 0:
            x = x_ref[...]
        else:
            x = h_refs[(li - 1) % 2][:, :in_pad]

        # MXU matmul: bf16 operands, f32 accumulation, contraction on W's axis 0
        # (W was pre-transposed to (in, out) at prep time -> no in-kernel transpose).
        y = jax.lax.dot_general(
            x, w_ref[...],
            dimension_numbers=(((1,), (0,)), ((), ())),
            preferred_element_type=jnp.float32,
        )
        bgb = bgb_ref[...]            # (3, out_pad): rows = bias, gamma, beta
        y = y + bgb[0:1, :]

        if (not is_last) or activate_final:
            # LayerNorm over the true feature lanes.  Padded lanes of y are exact
            # zeros (zero weight cols + zero bias), so the mean sum is unaffected;
            # their -mean leakage into the variance is removed with the exact
            # closed-form correction instead of a per-lane mask.
            inv_d = 1.0 / out_true
            mean = jnp.sum(y, axis=-1, keepdims=True) * inv_d
            centered = y - mean
            sq = jnp.sum(centered * centered, axis=-1, keepdims=True)
            if out_pad != out_true:
                sq = sq - float(out_pad - out_true) * (mean * mean)
            yn = centered * jax.lax.rsqrt(sq * inv_d + _LN_EPS)
            # gamma/beta are zero on padded lanes -> padded activations stay exactly 0.
            yn = yn * bgb[1:2, :] + bgb[2:3, :]
            y = yn * jax.nn.sigmoid(yn)          # SiLU (sigmoid on the EUP)

        if is_last:
            o_ref[...] = y.astype(o_ref.dtype)
        else:
            # Only next-layer bf16 MXU operand consumes this -> store bf16.
            h_refs[li % 2][:, :out_pad] = y.astype(jnp.bfloat16)


def prepare_encoder_params(params):
    """One-time prep: pad feature dims to 128, pre-transpose W to (in, out) bf16,
    pack bias/gamma/beta into a single (3, out_pad) f32 array per layer."""
    prepared = []
    layer_dims = []
    prev_out = None
    for w, b, gamma, beta in params:        # w: (out_dim, in_dim), PyTorch Linear layout
        out_d, in_d = w.shape
        # The ping-pong scratch is never zero-initialized; correctness relies on
        # in_pad(layer i+1) == out_pad(layer i), which follows from this invariant:
        assert prev_out is None or in_d == prev_out, "layer dims must chain"
        in_p = _round_up(in_d, _LANE)
        out_p = _round_up(out_d, _LANE)
        w_t = jnp.zeros((in_p, out_p), jnp.bfloat16)
        w_t = w_t.at[:in_d, :out_d].set(jnp.asarray(w).T.astype(jnp.bfloat16))
        bgb = jnp.zeros((3, out_p), jnp.float32)
        bgb = bgb.at[0, :out_d].set(b).at[1, :out_d].set(gamma).at[2, :out_d].set(beta)
        prepared += [w_t, bgb]
        layer_dims.append((in_d, out_d, in_p, out_p))
        prev_out = out_d
    return tuple(prepared), tuple(layer_dims)


def _patchify(x, patch_size):
    """(B, C, H, W) -> (B*num_patches, C*p*p) row-major patch matrix."""
    B, C, H, W = x.shape
    p = patch_size
    x = x.reshape(B, C, H // p, p, W // p, p)
    x = x.transpose(0, 2, 4, 1, 3, 5)  # (B, H/p, W/p, C, p, p)
    return x.reshape(B * (H // p) * (W // p), C * p * p)


@functools.partial(jax.jit, static_argnames=("layer_dims", "patch_size", "activate_final"))
def pretrained_image_encoder_forward(x, prepared, layer_dims, patch_size=4,
                                     activate_final=False):
    """x: (B, C, H, W) float32 -> last_hidden_state (B, num_patches, feat_dim)."""
    B, C, H, W = x.shape
    n_patches = (H // patch_size) * (W // patch_size)
    x2d = _patchify(x, patch_size)
    rows, in_d0 = x2d.shape

    in_p0 = layer_dims[0][2]
    out_true = layer_dims[-1][1]
    out_p_last = layer_dims[-1][3]
    max_pad = max(d[3] for d in layer_dims)

    param_bytes = sum(int(p.size) * p.dtype.itemsize for p in prepared)
    vmem_cap = _vmem_capacity_bytes()

    # --- Row tile sizing from the VMEM budget (not hard-coded) -----------------
    # Per-row bytes: double-buffered bf16 x tile + double-buffered f32 out tile
    # + two bf16 activation scratch buffers (single-buffered scratch).
    per_row = 2 * in_p0 * 2 + 2 * out_p_last * 4 + 2 * max_pad * 2
    tile_budget = max(vmem_cap - 2 * param_bytes - (12 << 20), 1 << 20)
    tile_cap = max(_ROW_ALIGN,
                   min(2048, int(tile_budget // per_row) // _ROW_ALIGN * _ROW_ALIGN))

    rows_a = _round_up(rows, _ROW_ALIGN)
    if rows_a <= tile_cap:
        # Whole problem fits in one tile: split into 2 grid steps when possible so the
        # "parallel" row axis can shard across the two TensorCores (v7x megacore).
        if rows_a >= 2 * _ROW_ALIGN:
            tile_rows = _round_up(rows_a // 2, _ROW_ALIGN)
        else:
            tile_rows = rows_a
    else:
        tile_rows = tile_cap
    rows_pad = _round_up(rows, tile_rows)

    # Streamed input in bf16 (the matmul consumes bf16 anyway): half the DMA bytes.
    # Zero-padded rows go through LN of a near-constant row (finite with eps) and are
    # sliced off below — do not remove the final slice.
    x_p = jnp.zeros((rows_pad, in_p0), jnp.bfloat16)
    x_p = x_p.at[:rows, :in_d0].set(x2d.astype(jnp.bfloat16))

    in_specs = [pl.BlockSpec((tile_rows, in_p0), lambda r: (r, 0))]
    for _, _, in_p, out_p in layer_dims:
        in_specs += [
            pl.BlockSpec((in_p, out_p), lambda r: (0, 0)),   # W (in, out) bf16
            pl.BlockSpec((3, out_p), lambda r: (0, 0)),      # packed bias/gamma/beta
        ]

    # VMEM: double-buffered params + x/out tiles, plus the two bf16 scratch buffers.
    vmem_bytes = (2 * param_bytes
                  + 2 * tile_rows * in_p0 * 2
                  + 2 * tile_rows * out_p_last * 4
                  + 2 * tile_rows * max_pad * 2
                  + (2 << 20))
    vmem_bytes = min(max(vmem_bytes, 4 << 20), max(vmem_cap - (4 << 20), 4 << 20))

    kernel = functools.partial(
        _fused_encoder_kernel, layer_dims=layer_dims, activate_final=activate_final)

    out = pl.pallas_call(
        kernel,
        out_shape=jax.ShapeDtypeStruct((rows_pad, out_p_last), jnp.float32),
        grid_spec=pltpu.PrefetchScalarGridSpec(
            num_scalar_prefetch=0,
            grid=(rows_pad // tile_rows,),
            in_specs=in_specs,
            out_specs=pl.BlockSpec((tile_rows, out_p_last), lambda r: (r, 0)),
            scratch_shapes=[pltpu.VMEM((tile_rows, max_pad), jnp.bfloat16),
                            pltpu.VMEM((tile_rows, max_pad), jnp.bfloat16)],
        ),
        compiler_params=pltpu.CompilerParams(
            dimension_semantics=("parallel",),
            vmem_limit_bytes=int(vmem_bytes),
        ),
    )(x_p, *prepared)

    feats = out[:rows, :out_true]
    return feats.reshape(B, n_patches, out_true)


def init_encoder_params(key, input_dim, hidden_dims):
    """torch.nn.Linear-style init; LayerNorm gamma=1, beta=0."""
    params = []
    in_dim = input_dim
    for out_dim in hidden_dims:
        key, kw, kb = jax.random.split(key, 3)
        bound = 1.0 / float(in_dim) ** 0.5
        w = jax.random.uniform(kw, (out_dim, in_dim), jnp.float32, -bound, bound)
        b = jax.random.uniform(kb, (out_dim,), jnp.float32, -bound, bound)
        gamma = jnp.ones((out_dim,), jnp.float32)
        beta = jnp.zeros((out_dim,), jnp.float32)
        params.append((w, b, gamma, beta))
        in_dim = out_dim
    return params


def encoder_reference(x, params, *, patch_size=4, activate_final=False):
    """Pure-JAX reference mirroring the kernel numerics (bf16 matmul, f32 epilogue)."""
    B, C, H, W = x.shape
    n_patches = (H // patch_size) * (W // patch_size)
    h = _patchify(x, patch_size)
    n = len(params)
    for idx, (w, b, gamma, beta) in enumerate(params):
        is_last = idx == n - 1
        y = jax.lax.dot_general(
            h.astype(jnp.bfloat16), w.astype(jnp.bfloat16),
            dimension_numbers=(((1,), (1,)), ((), ())),
            preferred_element_type=jnp.float32,
        ) + b
        if (not is_last) or activate_final:
            mean = jnp.mean(y, axis=-1, keepdims=True)
            var = jnp.mean((y - mean) ** 2, axis=-1, keepdims=True)
            y = (y - mean) * jax.lax.rsqrt(var + _LN_EPS)
            y = y * gamma + beta
            y = y * jax.nn.sigmoid(y)
        h = y
    return h.reshape(B, n_patches, -1)


if __name__ == "__main__":
    key = jax.random.PRNGKey(0)
    key, kx, kp = jax.random.split(key, 3)

    B, C, H, W = 2, 4, 16, 16
    patch = 4
    hidden_dims = [96, 96, 64]          # final dim plays the role of hidden_sizes[-1]

    x = jax.random.normal(kx, (B, C, H, W), jnp.float32)
    params = init_encoder_params(kp, C * patch * patch, hidden_dims)

    # Param prep (pad / transpose / bf16 cast / pack) hoisted out of the per-call path.
    prepared, layer_dims = prepare_encoder_params(params)

    feats = pretrained_image_encoder_forward(x, prepared, layer_dims, patch_size=patch)
    feats = jax.block_until_ready(feats)

    ref = encoder_reference(x, params, patch_size=patch)
    assert feats.shape == (B, (H // patch) * (W // patch), hidden_dims[-1])
    assert jnp.allclose(feats, ref, atol=1e-2, rtol=1e-2), "mismatch vs reference"

    print("KERNEL_OK")
</pallas_src>

<mosaic_0001>
module attributes {stable_mosaic.version = 11 : i64} {
  func.func @_fused_encoder_kernel(%arg0: i32, %arg1: memref<16x128xbf16, #tpu.memory_space<vmem>>, %arg2: memref<128x128xbf16, #tpu.memory_space<vmem>>, %arg3: memref<3x128xf32, #tpu.memory_space<vmem>>, %arg4: memref<128x128xbf16, #tpu.memory_space<vmem>>, %arg5: memref<3x128xf32, #tpu.memory_space<vmem>>, %arg6: memref<128x128xbf16, #tpu.memory_space<vmem>>, %arg7: memref<3x128xf32, #tpu.memory_space<vmem>>, %arg8: memref<16x128xf32, #tpu.memory_space<vmem>>, %arg9: memref<16x128xbf16, #tpu.memory_space<vmem>>, %arg10: memref<16x128xbf16, #tpu.memory_space<vmem>>) attributes {dimension_semantics = [#tpu.dimension_semantics<parallel>], iteration_bounds = array<i64: 2>, scalar_prefetch = 0 : i64, scratch_operands = 2 : i64, tpu.core_type = #tpu.core_type<tc>, window_params = [{transform_indices = @transform_0, window_bounds = array<i64: 16, 128>}, {pipeline_mode = #tpu.pipeline_mode<synchronous>, transform_indices = @transform_1, window_bounds = array<i64: 128, 128>}, {pipeline_mode = #tpu.pipeline_mode<synchronous>, transform_indices = @transform_2, window_bounds = array<i64: 3, 128>}, {pipeline_mode = #tpu.pipeline_mode<synchronous>, transform_indices = @transform_3, window_bounds = array<i64: 128, 128>}, {pipeline_mode = #tpu.pipeline_mode<synchronous>, transform_indices = @transform_4, window_bounds = array<i64: 3, 128>}, {pipeline_mode = #tpu.pipeline_mode<synchronous>, transform_indices = @transform_5, window_bounds = array<i64: 128, 128>}, {pipeline_mode = #tpu.pipeline_mode<synchronous>, transform_indices = @transform_6, window_bounds = array<i64: 3, 128>}, {transform_indices = @transform_7, window_bounds = array<i64: 16, 128>}]} {
    %c0 = arith.constant 0 : index
    %c0_0 = arith.constant 0 : index
    %0 = vector.load %arg1[%c0, %c0_0] : memref<16x128xbf16, #tpu.memory_space<vmem>>, vector<16x128xbf16>
    %c0_1 = arith.constant 0 : index
    %c0_2 = arith.constant 0 : index
    %1 = vector.load %arg2[%c0_1, %c0_2] : memref<128x128xbf16, #tpu.memory_space<vmem>>, vector<128x128xbf16>
    %cst = arith.constant dense<0.000000e+00> : vector<16x128xf32>
    %2 = tpu.matmul %0, %1, %cst {dimension_numbers = #tpu.dot_dimension_numbers<[1], [0], [0], [1], [0, 0, 1, 1], [], []>} : vector<16x128xbf16>, vector<128x128xbf16>, vector<16x128xf32> -> vector<16x128xf32>
    %c0_3 = arith.constant 0 : index
    %c0_4 = arith.constant 0 : index
    %3 = vector.load %arg3[%c0_3, %c0_4] : memref<3x128xf32, #tpu.memory_space<vmem>>, vector<3x128xf32>
    %4 = vector.extract_strided_slice %3 {offsets = [0, 0], sizes = [1, 128], strides = [1, 1]} : vector<3x128xf32> to vector<1x128xf32>
    %5 = vector.broadcast %4 : vector<1x128xf32> to vector<16x128xf32>
    %6 = arith.addf %2, %5 : vector<16x128xf32>
    %cst_5 = arith.constant dense<0.000000e+00> : vector<16xf32>
    %7 = vector.multi_reduction <add>, %6, %cst_5 [1] : vector<16x128xf32> to vector<16xf32>
    %8 = vector.shape_cast %7 : vector<16xf32> to vector<16x1xf32>
    %cst_6 = arith.constant 0.010416667 : f32
    %9 = vector.broadcast %cst_6 : f32 to vector<16x1xf32>
    %10 = arith.mulf %8, %9 : vector<16x1xf32>
    %11 = vector.broadcast %10 : vector<16x1xf32> to vector<16x128xf32>
    %12 = arith.subf %6, %11 : vector<16x128xf32>
    %13 = arith.mulf %12, %12 : vector<16x128xf32>
    %cst_7 = arith.constant dense<0.000000e+00> : vector<16xf32>
    %14 = vector.multi_reduction <add>, %13, %cst_7 [1] : vector<16x128xf32> to vector<16xf32>
    %15 = vector.shape_cast %14 : vector<16xf32> to vector<16x1xf32>
    %16 = arith.mulf %10, %10 : vector<16x1xf32>
    %cst_8 = arith.constant 3.200000e+01 : f32
    %17 = vector.broadcast %cst_8 : f32 to vector<16x1xf32>
    %18 = arith.mulf %17, %16 : vector<16x1xf32>
    %19 = arith.subf %15, %18 : vector<16x1xf32>
    %cst_9 = arith.constant 0.010416667 : f32
    %20 = vector.broadcast %cst_9 : f32 to vector<16x1xf32>
    %21 = arith.mulf %19, %20 : vector<16x1xf32>
    %cst_10 = arith.constant 9.99999974E-6 : f32
    %22 = vector.broadcast %cst_10 : f32 to vector<16x1xf32>
    %23 = arith.addf %21, %22 : vector<16x1xf32>
    %24 = math.rsqrt %23 : vector<16x1xf32>
    %25 = vector.broadcast %24 : vector<16x1xf32> to vector<16x128xf32>
    %26 = arith.mulf %12, %25 : vector<16x128xf32>
    %27 = vector.extract_strided_slice %3 {offsets = [1, 0], sizes = [1, 128], strides = [1, 1]} : vector<3x128xf32> to vector<1x128xf32>
    %28 = vector.broadcast %27 : vector<1x128xf32> to vector<16x128xf32>
    %29 = arith.mulf %26, %28 : vector<16x128xf32>
    %30 = vector.extract_strided_slice %3 {offsets = [2, 0], sizes = [1, 128], strides = [1, 1]} : vector<3x128xf32> to vector<1x128xf32>
    %31 = vector.broadcast %30 : vector<1x128xf32> to vector<16x128xf32>
    %32 = arith.addf %29, %31 : vector<16x128xf32>
    %33 = arith.negf %32 : vector<16x128xf32>
    %34 = math.exp %33 : vector<16x128xf32>
    %cst_11 = arith.constant 1.000000e+00 : f32
    %35 = vector.broadcast %cst_11 : f32 to vector<16x128xf32>
    %36 = arith.addf %35, %34 : vector<16x128xf32>
    %37 = arith.divf %35, %36 : vector<16x128xf32>
    %38 = arith.mulf %32, %37 : vector<16x128xf32>
    %39 = arith.truncf %38 : vector<16x128xf32> to vector<16x128xbf16>
    %c0_12 = arith.constant 0 : index
    %c0_13 = arith.constant 0 : index
    %40 = vector.load %arg9[%c0_12, %c0_13] : memref<16x128xbf16, #tpu.memory_space<vmem>>, vector<16x128xbf16>
    tpu.vector_store %arg9[%c0_12, %c0_13], %39 {strides = array<i32>} : memref<16x128xbf16, #tpu.memory_space<vmem>>, vector<16x128xbf16>,
    %c0_14 = arith.constant 0 : index
    %c0_15 = arith.constant 0 : index
    %41 = vector.load %arg9[%c0_14, %c0_15] : memref<16x128xbf16, #tpu.memory_space<vmem>>, vector<16x128xbf16>
    %c0_16 = arith.constant 0 : index
    %c0_17 = arith.constant 0 : index
    %42 = vector.load %arg4[%c0_16, %c0_17] : memref<128x128xbf16, #tpu.memory_space<vmem>>, vector<128x128xbf16>
    %cst_18 = arith.constant dense<0.000000e+00> : vector<16x128xf32>
    %43 = tpu.matmul %41, %42, %cst_18 {dimension_numbers = #tpu.dot_dimension_numbers<[1], [0], [0], [1], [0, 0, 1, 1], [], []>} : vector<16x128xbf16>, vector<128x128xbf16>, vector<16x128xf32> -> vector<16x128xf32>
    %c0_19 = arith.constant 0 : index
    %c0_20 = arith.constant 0 : index
    %44 = vector.load %arg5[%c0_19, %c0_20] : memref<3x128xf32, #tpu.memory_space<vmem>>, vector<3x128xf32>
    %45 = vector.extract_strided_slice %44 {offsets = [0, 0], sizes = [1, 128], strides = [1, 1]} : vector<3x128xf32> to vector<1x128xf32>
    %46 = vector.broadcast %45 : vector<1x128xf32> to vector<16x128xf32>
    %47 = arith.addf %43, %46 : vector<16x128xf32>
    %cst_21 = arith.constant dense<0.000000e+00> : vector<16xf32>
    %48 = vector.multi_reduction <add>, %47, %cst_21 [1] : vector<16x128xf32> to vector<16xf32>
    %49 = vector.shape_cast %48 : vector<16xf32> to vector<16x1xf32>
    %cst_22 = arith.constant 0.010416667 : f32
    %50 = vector.broadcast %cst_22 : f32 to vector<16x1xf32>
    %51 = arith.mulf %49, %50 : vector<16x1xf32>
    %52 = vector.broadcast %51 : vector<16x1xf32> to vector<16x128xf32>
    %53 = arith.subf %47, %52 : vector<16x128xf32>
    %54 = arith.mulf %53, %53 : vector<16x128xf32>
    %cst_23 = arith.constant dense<0.000000e+00> : vector<16xf32>
    %55 = vector.multi_reduction <add>, %54, %cst_23 [1] : vector<16x128xf32> to vector<16xf32>
    %56 = vector.shape_cast %55 : vector<16xf32> to vector<16x1xf32>
    %57 = arith.mulf %51, %51 : vector<16x1xf32>
    %cst_24 = arith.constant 3.200000e+01 : f32
    %58 = vector.broadcast %cst_24 : f32 to vector<16x1xf32>
    %59 = arith.mulf %58, %57 : vector<16x1xf32>
    %60 = arith.subf %56, %59 : vector<16x1xf32>
    %cst_25 = arith.constant 0.010416667 : f32
    %61 = vector.broadcast %cst_25 : f32 to vector<16x1xf32>
    %62 = arith.mulf %60, %61 : vector<16x1xf32>
    %cst_26 = arith.constant 9.99999974E-6 : f32
    %63 = vector.broadcast %cst_26 : f32 to vector<16x1xf32>
    %64 = arith.addf %62, %63 : vector<16x1xf32>
    %65 = math.rsqrt %64 : vector<16x1xf32>
    %66 = vector.broadcast %65 : vector<16x1xf32> to vector<16x128xf32>
    %67 = arith.mulf %53, %66 : vector<16x128xf32>
    %68 = vector.extract_strided_slice %44 {offsets = [1, 0], sizes = [1, 128], strides = [1, 1]} : vector<3x128xf32> to vector<1x128xf32>
    %69 = vector.broadcast %68 : vector<1x128xf32> to vector<16x128xf32>
    %70 = arith.mulf %67, %69 : vector<16x128xf32>
    %71 = vector.extract_strided_slice %44 {offsets = [2, 0], sizes = [1, 128], strides = [1, 1]} : vector<3x128xf32> to vector<1x128xf32>
    %72 = vector.broadcast %71 : vector<1x128xf32> to vector<16x128xf32>
    %73 = arith.addf %70, %72 : vector<16x128xf32>
    %74 = arith.negf %73 : vector<16x128xf32>
    %75 = math.exp %74 : vector<16x128xf32>
    %cst_27 = arith.constant 1.000000e+00 : f32
    %76 = vector.broadcast %cst_27 : f32 to vector<16x128xf32>
    %77 = arith.addf %76, %75 : vector<16x128xf32>
    %78 = arith.divf %76, %77 : vector<16x128xf32>
    %79 = arith.mulf %73, %78 : vector<16x128xf32>
    %80 = arith.truncf %79 : vector<16x128xf32> to vector<16x128xbf16>
    %c0_28 = arith.constant 0 : index
    %c0_29 = arith.constant 0 : index
    %81 = vector.load %arg10[%c0_28, %c0_29] : memref<16x128xbf16, #tpu.memory_space<vmem>>, vector<16x128xbf16>
    tpu.vector_store %arg10[%c0_28, %c0_29], %80 {strides = array<i32>} : memref<16x128xbf16, #tpu.memory_space<vmem>>, vector<16x128xbf16>,
    %c0_30 = arith.constant 0 : index
    %c0_31 = arith.constant 0 : index
    %82 = vector.load %arg10[%c0_30, %c0_31] : memref<16x128xbf16, #tpu.memory_space<vmem>>, vector<16x128xbf16>
    %c0_32 = arith.constant 0 : index
    %c0_33 = arith.constant 0 : index
    %83 = vector.load %arg6[%c0_32, %c0_33] : memref<128x128xbf16, #tpu.memory_space<vmem>>, vector<128x128xbf16>
    %cst_34 = arith.constant dense<0.000000e+00> : vector<16x128xf32>
    %84 = tpu.matmul %82, %83, %cst_34 {dimension_numbers = #tpu.dot_dimension_numbers<[1], [0], [0], [1], [0, 0, 1, 1], [], []>} : vector<16x128xbf16>, vector<128x128xbf16>, vector<16x128xf32> -> vector<16x128xf32>
    %c0_35 = arith.constant 0 : index
    %c0_36 = arith.constant 0 : index
    %85 = vector.load %arg7[%c0_35, %c0_36] : memref<3x128xf32, #tpu.memory_space<vmem>>, vector<3x128xf32>
    %86 = vector.extract_strided_slice %85 {offsets = [0, 0], sizes = [1, 128], strides = [1, 1]} : vector<3x128xf32> to vector<1x128xf32>
    %87 = vector.broadcast %86 : vector<1x128xf32> to vector<16x128xf32>
    %88 = arith.addf %84, %87 : vector<16x128xf32>
    %c0_37 = arith.constant 0 : index
    %c0_38 = arith.constant 0 : index
    %89 = vector.load %arg8[%c0_37, %c0_38] : memref<16x128xf32, #tpu.memory_space<vmem>>, vector<16x128xf32>
    tpu.vector_store %arg8[%c0_37, %c0_38], %88 {strides = array<i32>} : memref<16x128xf32, #tpu.memory_space<vmem>>, vector<16x128xf32>,
    return
  }
  func.func @transform_0(%arg0: i32) -> (i32, i32) {
    %c0_i32 = arith.constant 0 : i32
    %c0_i32_0 = arith.constant 0 : i32
    return %arg0, %c0_i32 : i32, i32
  }
  func.func @transform_1(%arg0: i32) -> (i32, i32) {
    %c0_i32 = arith.constant 0 : i32
    %c0_i32_0 = arith.constant 0 : i32
    %c0_i32_1 = arith.constant 0 : i32
    return %c0_i32, %c0_i32_0 : i32, i32
  }
  func.func @transform_2(%arg0: i32) -> (i32, i32) {
    %c0_i32 = arith.constant 0 : i32
    %c0_i32_0 = arith.constant 0 : i32
    %c0_i32_1 = arith.constant 0 : i32
    return %c0_i32, %c0_i32_0 : i32, i32
  }
  func.func @transform_3(%arg0: i32) -> (i32, i32) {
    %c0_i32 = arith.constant 0 : i32
    %c0_i32_0 = arith.constant 0 : i32
    %c0_i32_1 = arith.constant 0 : i32
    return %c0_i32, %c0_i32_0 : i32, i32
  }
  func.func @transform_4(%arg0: i32) -> (i32, i32) {
    %c0_i32 = arith.constant 0 : i32
    %c0_i32_0 = arith.constant 0 : i32
    %c0_i32_1 = arith.constant 0 : i32
    return %c0_i32, %c0_i32_0 : i32, i32
  }
  func.func @transform_5(%arg0: i32) -> (i32, i32) {
    %c0_i32 = arith.constant 0 : i32
    %c0_i32_0 = arith.constant 0 : i32
    %c0_i32_1 = arith.constant 0 : i32
    return %c0_i32, %c0_i32_0 : i32, i32
  }
  func.func @transform_6(%arg0: i32) -> (i32, i32) {
    %c0_i32 = arith.constant 0 : i32
    %c0_i32_0 = arith.constant 0 : i32
    %c0_i32_1 = arith.constant 0 : i32
    return %c0_i32, %c0_i32_0 : i32, i32
  }
  func.func @transform_7(%arg0: i32) -> (i32, i32) {
    %c0_i32 = arith.constant 0 : i32
    %c0_i32_0 = arith.constant 0 : i32
    return %arg0, %c0_i32 : i32, i32
  }
}

</mosaic_0001>

<llo_original>
// kernel: pretrained_image_encoder_forward.1
$region0: #{pretrained_image_encoder_forward.1}
  #allocation0 [shape = 'u32[]', space=smem, size = 0x4, offset = 0x4, fixed_abs, tag = 'smem constant byte address 0x4 - core index']
  #allocation1 [shape = 'u32[144,128]{1,0:T(1,128)}', space=vmem, size = 0x12000, scoped, tag = 'internal scratch']
  #allocation2 [shape = 'bf16[16,128]{1,0:T(16,128)(2,1)}', space=vmem, size = 0x1000, scoped, tag = 'scratch operand']
  #allocation3 [shape = 'bf16[16,128]{1,0:T(16,128)(2,1)}', space=vmem, size = 0x1000, scoped, tag = 'scratch operand']
  %s0 = inlined_call_operand.vmem [shape: bf16[32,128], index: 0, kind: input, shape index: {}]
  %s1 = inlined_call_operand.vmem [shape: bf16[128,128], index: 1, kind: input, shape index: {}]
  %s2 = inlined_call_operand.vmem [shape: f32[3,128], index: 2, kind: input, shape index: {}]
  %s3 = inlined_call_operand.vmem [shape: bf16[128,128], index: 3, kind: input, shape index: {}]
  %s4 = inlined_call_operand.vmem [shape: f32[3,128], index: 4, kind: input, shape index: {}]
  %s5 = inlined_call_operand.vmem [shape: bf16[128,128], index: 5, kind: input, shape index: {}]
  %s6 = inlined_call_operand.vmem [shape: f32[3,128], index: 6, kind: input, shape index: {}]
  %s7 = inlined_call_operand.hbm [shape: f32[32,128], index: 7, kind: output, shape index: {}]
  %s8 = sld [smem:[#allocation0]]
  $region61: #{pretrained_image_encoder_forward.1} parent=0
    _
  %s10 = ssub.s32 1, %s8
  %s11 = scalar_select 0, %s10, %s8
  $region1: #{pretrained_image_encoder_forward.1} parent=0
    #allocation4 [shape = 'u8[16384]{0}', space=vmem, size = 0x4000, scoped, tag = 'output window, operand 0']
    #allocation5 [shape = 's32[2]{0}', space=sflag, size = 0x8, scoped, tag = 'scoped memory for pretrained_image_encoder_forward.1']
    %12 = vsyncpa [#allocation5], 0
    %s13 = scalar_lea.sflag [#allocation5], 1
    %14 = vsyncpa %s13, 0
    loop: start=0, step=1, limit=4
    $region2: #{pretrained_image_encoder_forward.1} parent=1 // loop_pre_header
      _
    $region3: #{pretrained_image_encoder_forward.1} parent=1 // loop_header
      %s16 = sphi 0, %s20
      %p17 = scmp.ge.s32.totalorder %s16, 4
      %s26 = sphi 0, %s28
      %s29 = sphi 0, %s26
      %s30 = sphi 0, %s29
      %s46 = sphi 0, %s30
      %s50 = sphi 0, %s50
      %s52 = sphi 0, %s50
      %s53 = sphi 0, %s52
      %s67 = sphi 0, %s53
      %s71 = sphi 0, %s71
      %s73 = sphi 0, %s71
      %s74 = sphi 0, %s73
      %s88 = sphi 0, %s74
      %s92 = sphi 0, %s92
      %s94 = sphi 0, %s92
      %s95 = sphi 0, %s94
      %s109 = sphi 0, %s95
      %s113 = sphi 0, %s113
      %s115 = sphi 0, %s113
      %s116 = sphi 0, %s115
      %s130 = sphi 0, %s116
      %s134 = sphi 0, %s134
      %s136 = sphi 0, %s134
      %s137 = sphi 0, %s136
      %s151 = sphi 0, %s137
      %s155 = sphi 0, %s155
      %s157 = sphi 0, %s155
      %s158 = sphi 0, %s157
      %s172 = sphi 0, %s158
      %s178 = sphi 0, %s180
      %s181 = sphi 0, %s178
      %s182 = sphi 0, %s181
      %s198 = sphi 0, %s182
    $region4: #{pretrained_image_encoder_forward.1} parent=1 // loop_header_branch
      %19 = sbr.rel (%p17) target = $region8
    $region5: #{pretrained_image_encoder_forward.1} parent=1 // loop_body
      %s21 = ssub.s32 %s16, 1
      %s22 = ssub.s32 %s16, 2
      %s23 = sadd.s32 %s16, 1
      %s24 = ssub.s32 %s16, %s23
      %p25 = scmp.eq.s32.totalorder %s24, 0
      %s27 = sadd.s32 %s26, 1
      %s28 = scalar_select %p25, %s26, %s27
      %p31 = pneg %p25
      %p32 = scmp.eq.s32.totalorder %s16, 1
      %p33 = por %p31, %p32
      %p34 = scmp.ne.s32.totalorder %s26, %s29
      %p35 = scmp.eq.s32.totalorder %s16, 0
      %p36 = por %p34, %p35
      %p37 = scmp.ne.s32.totalorder %s26, %s29
      %p38 = scmp.eq.s32.totalorder %s21, 1
      %p39 = por %p37, %p38
      %p40 = scmp.ne.s32.totalorder %s29, %s30
      %p41 = scmp.eq.s32.totalorder %s21, 0
      %p42 = por %p40, %p41
      %p43 = scmp.ne.s32.totalorder %s29, %s30
      %p44 = scmp.eq.s32.totalorder %s22, 1
      %p45 = por %p43, %p44
      %p47 = scmp.ne.s32.totalorder %s30, %s46
      %p48 = scmp.eq.s32.totalorder %s22, 0
      %p49 = por %p47, %p48
      %s51 = sadd.s32 %s50, 1
      %p54 = scmp.eq.s32.totalorder %s16, 1
      %p55 = scmp.ne.s32.totalorder %s50, %s52
      %p56 = scmp.eq.s32.totalorder %s16, 0
      %p57 = por %p55, %p56
      %p58 = scmp.ne.s32.totalorder %s50, %s52
      %p59 = scmp.eq.s32.totalorder %s21, 1
      %p60 = por %p58, %p59
      %p61 = scmp.ne.s32.totalorder %s52, %s53
      %p62 = scmp.eq.s32.totalorder %s21, 0
      %p63 = por %p61, %p62
      %p64 = scmp.ne.s32.totalorder %s52, %s53
      %p65 = scmp.eq.s32.totalorder %s22, 1
      %p66 = por %p64, %p65
      %p68 = scmp.ne.s32.totalorder %s53, %s67
      %p69 = scmp.eq.s32.totalorder %s22, 0
      %p70 = por %p68, %p69
      %s72 = sadd.s32 %s71, 1
      %p75 = scmp.eq.s32.totalorder %s16, 1
      %p76 = scmp.ne.s32.totalorder %s71, %s73
      %p77 = scmp.eq.s32.totalorder %s16, 0
      %p78 = por %p76, %p77
      %p79 = scmp.ne.s32.totalorder %s71, %s73
      %p80 = scmp.eq.s32.totalorder %s21, 1
      %p81 = por %p79, %p80
      %p82 = scmp.ne.s32.totalorder %s73, %s74
      %p83 = scmp.eq.s32.totalorder %s21, 0
      %p84 = por %p82, %p83
      %p85 = scmp.ne.s32.totalorder %s73, %s74
      %p86 = scmp.eq.s32.totalorder %s22, 1
      %p87 = por %p85, %p86
      %p89 = scmp.ne.s32.totalorder %s74, %s88
      %p90 = scmp.eq.s32.totalorder %s22, 0
      %p91 = por %p89, %p90
      %s93 = sadd.s32 %s92, 1
      %p96 = scmp.eq.s32.totalorder %s16, 1
      %p97 = scmp.ne.s32.totalorder %s92, %s94
      %p98 = scmp.eq.s32.totalorder %s16, 0
      %p99 = por %p97, %p98
      %p100 = scmp.ne.s32.totalorder %s92, %s94
      %p101 = scmp.eq.s32.totalorder %s21, 1
      %p102 = por %p100, %p101
      %p103 = scmp.ne.s32.totalorder %s94, %s95
      %p104 = scmp.eq.s32.totalorder %s21, 0
      %p105 = por %p103, %p104
      %p106 = scmp.ne.s32.totalorder %s94, %s95
      %p107 = scmp.eq.s32.totalorder %s22, 1
      %p108 = por %p106, %p107
      %p110 = scmp.ne.s32.totalorder %s95, %s109
      %p111 = scmp.eq.s32.totalorder %s22, 0
      %p112 = por %p110, %p111
      %s114 = sadd.s32 %s113, 1
      %p117 = scmp.eq.s32.totalorder %s16, 1
      %p118 = scmp.ne.s32.totalorder %s113, %s115
      %p119 = scmp.eq.s32.totalorder %s16, 0
      %p120 = por %p118, %p119
      %p121 = scmp.ne.s32.totalorder %s113, %s115
      %p122 = scmp.eq.s32.totalorder %s21, 1
      %p123 = por %p121, %p122
      %p124 = scmp.ne.s32.totalorder %s115, %s116
      %p125 = scmp.eq.s32.totalorder %s21, 0
      %p126 = por %p124, %p125
      %p127 = scmp.ne.s32.totalorder %s115, %s116
      %p128 = scmp.eq.s32.totalorder %s22, 1
      %p129 = por %p127, %p128
      %p131 = scmp.ne.s32.totalorder %s116, %s130
      %p132 = scmp.eq.s32.totalorder %s22, 0
      %p133 = por %p131, %p132
      %s135 = sadd.s32 %s134, 1
      %p138 = scmp.eq.s32.totalorder %s16, 1
      %p139 = scmp.ne.s32.totalorder %s134, %s136
      %p140 = scmp.eq.s32.totalorder %s16, 0
      %p141 = por %p139, %p140
      %p142 = scmp.ne.s32.totalorder %s134, %s136
      %p143 = scmp.eq.s32.totalorder %s21, 1
      %p144 = por %p142, %p143
      %p145 = scmp.ne.s32.totalorder %s136, %s137
      %p146 = scmp.eq.s32.totalorder %s21, 0
      %p147 = por %p145, %p146
      %p148 = scmp.ne.s32.totalorder %s136, %s137
      %p149 = scmp.eq.s32.totalorder %s22, 1
      %p150 = por %p148, %p149
      %p152 = scmp.ne.s32.totalorder %s137, %s151
      %p153 = scmp.eq.s32.totalorder %s22, 0
      %p154 = por %p152, %p153
      %s156 = sadd.s32 %s155, 1
      %p159 = scmp.eq.s32.totalorder %s16, 1
      %p160 = scmp.ne.s32.totalorder %s155, %s157
      %p161 = scmp.eq.s32.totalorder %s16, 0
      %p162 = por %p160, %p161
      %p163 = scmp.ne.s32.totalorder %s155, %s157
      %p164 = scmp.eq.s32.totalorder %s21, 1
      %p165 = por %p163, %p164
      %p166 = scmp.ne.s32.totalorder %s157, %s158
      %p167 = scmp.eq.s32.totalorder %s21, 0
      %p168 = por %p166, %p167
      %p169 = scmp.ne.s32.totalorder %s157, %s158
      %p170 = scmp.eq.s32.totalorder %s22, 1
      %p171 = por %p169, %p170
      %p173 = scmp.ne.s32.totalorder %s158, %s172
      %p174 = scmp.eq.s32.totalorder %s22, 0
      %p175 = por %p173, %p174
      %s176 = ssub.s32 %s16, %s23
      %p177 = scmp.eq.s32.totalorder %s176, 0
      %s179 = sadd.s32 %s178, 1
      %s180 = scalar_select %p177, %s178, %s179
      %p183 = pneg %p177
      %p184 = scmp.eq.s32.totalorder %s16, 1
      %p185 = por %p183, %p184
      %p186 = scmp.ne.s32.totalorder %s178, %s181
      %p187 = scmp.eq.s32.totalorder %s16, 0
      %p188 = por %p186, %p187
      %p189 = scmp.ne.s32.totalorder %s178, %s181
      %p190 = scmp.eq.s32.totalorder %s21, 1
      %p191 = por %p189, %p190
      %p192 = scmp.ne.s32.totalorder %s181, %s182
      %p193 = scmp.eq.s32.totalorder %s21, 0
      %p194 = por %p192, %p193
      %p195 = scmp.ne.s32.totalorder %s181, %s182
      %p196 = scmp.eq.s32.totalorder %s22, 1
      %p197 = por %p195, %p196
      %p199 = scmp.ne.s32.totalorder %s182, %s198
      %p200 = scmp.eq.s32.totalorder %s22, 0
      %p201 = por %p199, %p200
      %p202 = scmp.le.s32.totalorder 1, %s16
      %p203 = scmp.lt.s32.totalorder %s16, 3
      %p204 = pnand %p202, %p203
      %p205 = pneg %p204
      // Predicated region
      $region9: #{pretrained_image_encoder_forward.1} parent=5 // pred_check
        _
      $region10: #{pretrained_image_encoder_forward.1} parent=5 // pred_check_branch
        %207 = sbr.rel (%p204) target = $region12
      $region11: #{pretrained_image_encoder_forward.1} parent=5 // pred_region
        %s208 = ssub.s32 %s16, 1
        // Predicated region
        $region13: #{pretrained_image_encoder_forward.1} parent=11 // pred_check
          %p209 = pneg %p63
        $region14: #{pretrained_image_encoder_forward.1} parent=11 // pred_check_branch
          %211 = sbr.rel (%p209) target = $region16
        $region15: #{pretrained_image_encoder_forward.1} parent=11 // pred_region
          _
        $region16: #{pretrained_image_encoder_forward.1} parent=11 // pred_fallthru
          _
        // Predicated region
        $region17: #{pretrained_image_encoder_forward.1} parent=11 // pred_check
          %p212 = pneg %p84
        $region18: #{pretrained_image_encoder_forward.1} parent=11 // pred_check_branch
          %214 = sbr.rel (%p212) target = $region20
        $region19: #{pretrained_image_encoder_forward.1} parent=11 // pred_region
          _
        $region20: #{pretrained_image_encoder_forward.1} parent=11 // pred_fallthru
          _
        // Predicated region
        $region21: #{pretrained_image_encoder_forward.1} parent=11 // pred_check
          %p215 = pneg %p105
        $region22: #{pretrained_image_encoder_forward.1} parent=11 // pred_check_branch
          %217 = sbr.rel (%p215) target = $region24
        $region23: #{pretrained_image_encoder_forward.1} parent=11 // pred_region
          _
        $region24: #{pretrained_image_encoder_forward.1} parent=11 // pred_fallthru
          _
        // Predicated region
        $region25: #{pretrained_image_encoder_forward.1} parent=11 // pred_check
          %p218 = pneg %p126
        $region26: #{pretrained_image_encoder_forward.1} parent=11 // pred_check_branch
          %220 = sbr.rel (%p218) target = $region28
        $region27: #{pretrained_image_encoder_forward.1} parent=11 // pred_region
          _
        $region28: #{pretrained_image_encoder_forward.1} parent=11 // pred_fallthru
          _
        // Predicated region
        $region29: #{pretrained_image_encoder_forward.1} parent=11 // pred_check
          %p221 = pneg %p147
        $region30: #{pretrained_image_encoder_forward.1} parent=11 // pred_check_branch
          %223 = sbr.rel (%p221) target = $region32
        $region31: #{pretrained_image_encoder_forward.1} parent=11 // pred_region
          _
        $region32: #{pretrained_image_encoder_forward.1} parent=11 // pred_fallthru
          _
        // Predicated region
        $region33: #{pretrained_image_encoder_forward.1} parent=11 // pred_check
          %p224 = pneg %p168
        $region34: #{pretrained_image_encoder_forward.1} parent=11 // pred_check_branch
          %226 = sbr.rel (%p224) target = $region36
        $region35: #{pretrained_image_encoder_forward.1} parent=11 // pred_region
          _
        $region36: #{pretrained_image_encoder_forward.1} parent=11 // pred_fallthru
          _
      $region12: #{pretrained_image_encoder_forward.1} parent=5 // pred_fallthru
        _
      %p227 = scmp.lt.s32.totalorder %s16, 2
      // Predicated region
      $region37: #{pretrained_image_encoder_forward.1} parent=5 // pred_check
        %p228 = pneg %p227
      $region38: #{pretrained_image_encoder_forward.1} parent=5 // pred_check_branch
        %230 = sbr.rel (%p228) target = $region40
      $region39: #{pretrained_image_encoder_forward.1} parent=5 // pred_region
        // Predicated region
        $region41: #{pretrained_image_encoder_forward.1} parent=39 // pred_check
          %p231 = pneg %p36
        $region42: #{pretrained_image_encoder_forward.1} parent=39 // pred_check_branch
          %233 = sbr.rel (%p231) target = $region44
        $region43: #{pretrained_image_encoder_forward.1} parent=39 // pred_region
          %s234 = smul.u32 2, %s16
          %p235 = scmp.lt.s32.totalorder %s234, 3
          %s236 = scalar_select %p235, %s234, 3
          %s237 = smul.addr %s236, 4
          %s238 = scalar_lea.vmem %s0, %s237
          %s239 = smul.u32 2, %s16
        $region44: #{pretrained_image_encoder_forward.1} parent=39 // pred_fallthru
          _
      $region40: #{pretrained_image_encoder_forward.1} parent=5 // pred_fallthru
        _
      %p240 = scmp.le.s32.totalorder 1, %s16
      %p241 = scmp.lt.s32.totalorder %s16, 3
      %p242 = pnand %p240, %p241
      %p243 = pneg %p242
      // Predicated region
      $region45: #{pretrained_image_encoder_forward.1} parent=5 // pred_check
        _
      $region46: #{pretrained_image_encoder_forward.1} parent=5 // pred_check_branch
        %245 = sbr.rel (%p242) target = $region48
      $region47: #{pretrained_image_encoder_forward.1} parent=5 // pred_region
        %s246 = ssub.s32 %s16, 1
        %s247 = smul.u32 2, %s21
        %p248 = scmp.lt.s32.totalorder %s247, 3
        %s249 = scalar_select %p248, %s247, 3
        %s250 = smul.addr %s249, 4
        %s251 = scalar_lea.vmem %s0, %s250
        %p252 = pneg %p42
        %p253 = pneg %p39
        %p254 = pneg %p63
        %p255 = pneg %p60
        %p256 = pneg %p84
        %p257 = pneg %p81
        %p258 = pneg %p105
        %p259 = pneg %p102
        %p260 = pneg %p126
        %p261 = pneg %p123
        %p262 = pneg %p147
        %p263 = pneg %p144
        %p264 = pneg %p168
        %p265 = pneg %p165
        %p266 = pneg %p194
        %p267 = pneg %p191
        %s268 = sand.u32 %s181, 1
        %s269 = scalar_lea.sflag [#allocation5], %s268
        %s270 = sand.u32 %s181, 1
        %s271 = smul.addr %s270, 16
        %s272 = scalar_lea.vmem [#allocation4], %s271
        %s273 = smul.u32 2, %s21
        %p274 = scmp.lt.s32.totalorder %s273, 3
        %s275 = scalar_select %p274, %s273, 3
        %s276 = smul.addr %s275, 4
        %s277 = scalar_lea.vmem %s0, %s276
        %s278 = smul.u32 2, %s21
        %s279 = smul.u32 2, %s21
        %v281 = vld [vmem:[%s277] sm:$0xf]
        %v282 = vld [vmem:[%s277 + $0x4] sm:$0xf]
        %v283 = vld [vmem:[%s1] sm:$0xf]
        %v284 = vld [vmem:[%s1 + $0x4] sm:$0xf]
        %v285 = vld [vmem:[%s1 + $0x8] sm:$0xf]
        %v286 = vld [vmem:[%s1 + $0xc] sm:$0xf]
        %v287 = vld [vmem:[%s1 + $0x10] sm:$0xf]
        %v288 = vld [vmem:[%s1 + $0x14] sm:$0xf]
        %v289 = vld [vmem:[%s1 + $0x18] sm:$0xf]
        %v290 = vld [vmem:[%s1 + $0x1c] sm:$0xf]
        %v291 = vld [vmem:[%s1 + $0x20] sm:$0xf]
        %v292 = vld [vmem:[%s1 + $0x24] sm:$0xf]
        %v293 = vld [vmem:[%s1 + $0x28] sm:$0xf]
        %v294 = vld [vmem:[%s1 + $0x2c] sm:$0xf]
        %v295 = vld [vmem:[%s1 + $0x30] sm:$0xf]
        %v296 = vld [vmem:[%s1 + $0x34] sm:$0xf]
        %v297 = vld [vmem:[%s1 + $0x38] sm:$0xf]
        %v298 = vld [vmem:[%s1 + $0x3c] sm:$0xf]
        %v299 = vld [vmem:[%s2] sm:$0x7]
        %v300 = vlaneseq
        %v301 = vshrl.u32 %v300, 7
        %v302 = vsub.s32 0, %v301
        %v303 = vrot.slane %v299, %v302
        %v306 = vunpack.c.l.b16 %v281
        %v307 = vunpack.c.l.b16 %v282
        %v308 = vpack.c.b16 %v307, %v306
        %v326 = vunpack.c.l.b16 %v283
        %v327 = vunpack.c.l.b16 %v284
        %v328 = vunpack.c.l.b16 %v285
        %v329 = vunpack.c.l.b16 %v286
        %v330 = vunpack.c.l.b16 %v287
        %v331 = vunpack.c.l.b16 %v288
        %v332 = vunpack.c.l.b16 %v289
        %v333 = vunpack.c.l.b16 %v290
        %v334 = vunpack.c.l.b16 %v291
        %v335 = vunpack.c.l.b16 %v292
        %v336 = vunpack.c.l.b16 %v293
        %v337 = vunpack.c.l.b16 %v294
        %v338 = vunpack.c.l.b16 %v295
        %v339 = vunpack.c.l.b16 %v296
        %v340 = vunpack.c.l.b16 %v297
        %v341 = vunpack.c.l.b16 %v298
        %v342 = vpack.c.b16 %v327, %v326
        %v343 = vpack.c.b16 %v329, %v328
        %v344 = vpack.c.b16 %v331, %v330
        %v345 = vpack.c.b16 %v333, %v332
        %v346 = vpack.c.b16 %v335, %v334
        %v347 = vpack.c.b16 %v337, %v336
        %v348 = vpack.c.b16 %v339, %v338
        %v349 = vpack.c.b16 %v341, %v340
        %358 = vmatprep.subr.bf16.mxu0 0
        %359 = vmatpush1.bf16.msra.mxu0 %v342
        %360 = vmatprep.subr.bf16.mxu0 0
        %361 = vmatpush1.bf16.msra.mxu0 %v343
        %362 = vmatprep.subr.bf16.mxu0 0
        %363 = vmatpush1.bf16.msra.mxu0 %v344
        %364 = vmatprep.subr.bf16.mxu0 0
        %365 = vmatpush1.bf16.msra.mxu0 %v345
        %366 = vmatprep.subr.bf16.mxu0 0
        %367 = vmatpush1.bf16.msra.mxu0 %v346
        %368 = vmatprep.subr.bf16.mxu0 0
        %369 = vmatpush1.bf16.msra.mxu0 %v347
        %370 = vmatprep.subr.bf16.mxu0 0
        %371 = vmatpush1.bf16.msra.mxu0 %v348
        %372 = vmatprep.subr.bf16.mxu0 0
        %373 = vmatpush1.bf16.msra.mxu0 %v349
        %374 = vmatprep.subr.bf16.mxu0 0
        %375 = vmatpush1.bf16.msra.mxu0 0
        %376 = vmatprep.subr.bf16.mxu0 0
        %377 = vmatpush1.bf16.msra.mxu0 0
        %378 = vmatprep.subr.bf16.mxu0 0
        %379 = vmatpush1.bf16.msra.mxu0 0
        %380 = vmatprep.subr.bf16.mxu0 0
        %381 = vmatpush1.bf16.msra.mxu0 0
        %382 = vmatprep.subr.bf16.mxu0 0
        %383 = vmatpush1.bf16.msra.mxu0 0
        %384 = vmatprep.subr.bf16.mxu0 0
        %385 = vmatpush1.bf16.msra.mxu0 0
        %386 = vmatprep.subr.bf16.mxu0 0
        %387 = vmatpush1.bf16.msra.mxu0 0
        %388 = vmatprep.subr.bf16.mxu0 0
        %389 = vmatpush1.bf16.msra.mxu0 0
        %390 = vmatprep.mubr.bf16.mxu0 0
        %391 = vmatmul.mubr.bf16.gmra.mrb[0].mxu0 %v308
        %v392 = vpop.f32.mrb[0].mxu0
        %v393 = vadd.f32 %v303, %v392
        %v394 = vpop.f32.mrb[0].mxu0
        %v395 = vpop.f32.mrb[0].mxu0
        %v396 = vadd.f32 %v303, %v395
        %v397 = vpop.f32.mrb[0].mxu0
        %398 = vdwg.mxu0
        %399 = vadd.xlane.f32.xlu0 %v393
        %v400 = vpop.xlane.xlu0 %399
        %401 = vadd.xlane.f32.xlu0 %v396
        %v402 = vpop.xlane.xlu0 %401
        %v403 = vmul.f32 %v400, 0.010416667
        %v404 = vmul.f32 %v402, 0.010416667
        %v405 = vsub.f32 %v393, %v403
        %v406 = vsub.f32 %v396, %v404
        %v407 = vmul.f32 %v405, %v405
        %v408 = vmul.f32 %v406, %v406
        %409 = vadd.xlane.f32.xlu0 %v407
        %v410 = vpop.xlane.xlu0 %409
        %411 = vadd.xlane.f32.xlu0 %v408
        %v412 = vpop.xlane.xlu0 %411
        %v413 = vmul.f32 %v403, %v403
        %v414 = vmul.f32 %v404, %v404
        %v415 = vmul.f32 %v413, 32.0
        %v416 = vmul.f32 %v414, 32.0
        %v417 = vsub.f32 %v410, %v415
        %v418 = vsub.f32 %v412, %v416
        %v419 = vmul.f32 %v417, 0.010416667
        %v420 = vmul.f32 %v418, 0.010416667
        %v421 = vadd.f32 %v419, 1e-05
        %v422 = vadd.f32 %v420, 1e-05
        %v423 = vrsqrt.pop %v421
        %v424 = vrsqrt.pop %v422
        %v425 = vmul.f32 %v405, %v423
        %v426 = vmul.f32 %v406, %v424
        %v427 = vlaneseq
        %v428 = vshrl.u32 %v427, 7
        %v429 = vsub.s32 1, %v428
        %v430 = vrot.slane %v299, %v429
        %v431 = vmul.f32 %v425, %v430
        %v432 = vmul.f32 %v426, %v430
        %v433 = vlaneseq
        %v434 = vshrl.u32 %v433, 7
        %v435 = vsub.s32 2, %v434
        %v436 = vrot.slane %v299, %v435
        %v437 = vadd.f32 %v431, %v436
        %v438 = vadd.f32 %v432, %v436
        %v439 = vxor.u32 %v437, 2147483648
        %v440 = vxor.u32 %v438, 2147483648
        %v441 = vmul.f32 %v439, 1.442695
        %v442 = vpow.pop %v441
        %v443 = vmul.f32 %v440, 1.442695
        %v444 = vpow.pop %v443
        %v445 = vadd.f32 %v442, 1.0
        %v446 = vadd.f32 %v444, 1.0
        %v447 = vrcp.pop %v445
        %v448 = vmul.f32 1.0, %v447
        %v449 = vrcp.pop %v446
        %v450 = vmul.f32 1.0, %v449
        %v451 = vmul.f32 %v437, %v448
        %v452 = vmul.f32 %v438, %v450
        %v453 = vpack.c.bf16 %v452, %v451
        %454 = vst [vmem:[#allocation2] sm:$0xff] %v453
        %v455 = vld [vmem:[#allocation2] sm:$0xff]
        %v456 = vld [vmem:[%s3] sm:$0xf]
        %v457 = vld [vmem:[%s3 + $0x4] sm:$0xf]
        %v458 = vld [vmem:[%s3 + $0x8] sm:$0xf]
        %v459 = vld [vmem:[%s3 + $0xc] sm:$0xf]
        %v460 = vld [vmem:[%s3 + $0x10] sm:$0xf]
        %v461 = vld [vmem:[%s3 + $0x14] sm:$0xf]
        %v462 = vld [vmem:[%s3 + $0x18] sm:$0xf]
        %v463 = vld [vmem:[%s3 + $0x1c] sm:$0xf]
        %v464 = vld [vmem:[%s3 + $0x20] sm:$0xf]
        %v465 = vld [vmem:[%s3 + $0x24] sm:$0xf]
        %v466 = vld [vmem:[%s3 + $0x28] sm:$0xf]
        %v467 = vld [vmem:[%s3 + $0x2c] sm:$0xf]
        %v468 = vld [vmem:[%s3 + $0x30] sm:$0xf]
        %v469 = vld [vmem:[%s3 + $0x34] sm:$0xf]
        %v470 = vld [vmem:[%s3 + $0x38] sm:$0xf]
        %v471 = vld [vmem:[%s3 + $0x3c] sm:$0xf]
        %v472 = vld [vmem:[%s4] sm:$0x7]
        %v473 = vlaneseq
        %v474 = vshrl.u32 %v473, 7
        %v475 = vsub.s32 0, %v474
        %v476 = vrot.slane %v472, %v475
        %v493 = vunpack.c.l.b16 %v456
        %v494 = vunpack.c.l.b16 %v457
        %v495 = vunpack.c.l.b16 %v458
        %v496 = vunpack.c.l.b16 %v459
        %v497 = vunpack.c.l.b16 %v460
        %v498 = vunpack.c.l.b16 %v461
        %v499 = vunpack.c.l.b16 %v462
        %v500 = vunpack.c.l.b16 %v463
        %v501 = vunpack.c.l.b16 %v464
        %v502 = vunpack.c.l.b16 %v465
        %v503 = vunpack.c.l.b16 %v466
        %v504 = vunpack.c.l.b16 %v467
        %v505 = vunpack.c.l.b16 %v468
        %v506 = vunpack.c.l.b16 %v469
        %v507 = vunpack.c.l.b16 %v470
        %v508 = vunpack.c.l.b16 %v471
        %v509 = vpack.c.b16 %v494, %v493
        %v510 = vpack.c.b16 %v496, %v495
        %v511 = vpack.c.b16 %v498, %v497
        %v512 = vpack.c.b16 %v500, %v499
        %v513 = vpack.c.b16 %v502, %v501
        %v514 = vpack.c.b16 %v504, %v503
        %v515 = vpack.c.b16 %v506, %v505
        %v516 = vpack.c.b16 %v508, %v507
        %525 = vmatprep.subr.bf16.mxu0 0
        %526 = vmatpush1.bf16.msra.mxu0 %v509
        %527 = vmatprep.subr.bf16.mxu0 0
        %528 = vmatpush1.bf16.msra.mxu0 %v510
        %529 = vmatprep.subr.bf16.mxu0 0
        %530 = vmatpush1.bf16.msra.mxu0 %v511
        %531 = vmatprep.subr.bf16.mxu0 0
        %532 = vmatpush1.bf16.msra.mxu0 %v512
        %533 = vmatprep.subr.bf16.mxu0 0
        %534 = vmatpush1.bf16.msra.mxu0 %v513
        %535 = vmatprep.subr.bf16.mxu0 0
        %536 = vmatpush1.bf16.msra.mxu0 %v514
        %537 = vmatprep.subr.bf16.mxu0 0
        %538 = vmatpush1.bf16.msra.mxu0 %v515
        %539 = vmatprep.subr.bf16.mxu0 0
        %540 = vmatpush1.bf16.msra.mxu0 %v516
        %541 = vmatprep.subr.bf16.mxu0 0
        %542 = vmatpush1.bf16.msra.mxu0 0
        %543 = vmatprep.subr.bf16.mxu0 0
        %544 = vmatpush1.bf16.msra.mxu0 0
        %545 = vmatprep.subr.bf16.mxu0 0
        %546 = vmatpush1.bf16.msra.mxu0 0
        %547 = vmatprep.subr.bf16.mxu0 0
        %548 = vmatpush1.bf16.msra.mxu0 0
        %549 = vmatprep.subr.bf16.mxu0 0
        %550 = vmatpush1.bf16.msra.mxu0 0
        %551 = vmatprep.subr.bf16.mxu0 0
        %552 = vmatpush1.bf16.msra.mxu0 0
        %553 = vmatprep.subr.bf16.mxu0 0
        %554 = vmatpush1.bf16.msra.mxu0 0
        %555 = vmatprep.subr.bf16.mxu0 0
        %556 = vmatpush1.bf16.msra.mxu0 0
        %557 = vmatprep.mubr.bf16.mxu0 0
        %558 = vmatmul.mubr.bf16.gmra.mrb[0].mxu0 %v455
        %v559 = vpop.f32.mrb[0].mxu0
        %v560 = vadd.f32 %v476, %v559
        %v561 = vpop.f32.mrb[0].mxu0
        %v562 = vpop.f32.mrb[0].mxu0
        %v563 = vadd.f32 %v476, %v562
        %v564 = vpop.f32.mrb[0].mxu0
        %565 = vdwg.mxu0
        %566 = vadd.xlane.f32.xlu0 %v560
        %v567 = vpop.xlane.xlu0 %566
        %568 = vadd.xlane.f32.xlu0 %v563
        %v569 = vpop.xlane.xlu0 %568
        %v570 = vmul.f32 %v567, 0.010416667
        %v571 = vmul.f32 %v569, 0.010416667
        %v572 = vsub.f32 %v560, %v570
        %v573 = vsub.f32 %v563, %v571
        %v574 = vmul.f32 %v572, %v572
        %v575 = vmul.f32 %v573, %v573
        %576 = vadd.xlane.f32.xlu0 %v574
        %v577 = vpop.xlane.xlu0 %576
        %578 = vadd.xlane.f32.xlu0 %v575
        %v579 = vpop.xlane.xlu0 %578
        %v580 = vmul.f32 %v570, %v570
        %v581 = vmul.f32 %v571, %v571
        %v582 = vmul.f32 %v580, 32.0
        %v583 = vmul.f32 %v581, 32.0
        %v584 = vsub.f32 %v577, %v582
        %v585 = vsub.f32 %v579, %v583
        %v586 = vmul.f32 %v584, 0.010416667
        %v587 = vmul.f32 %v585, 0.010416667
        %v588 = vadd.f32 %v586, 1e-05
        %v589 = vadd.f32 %v587, 1e-05
        %v590 = vrsqrt.pop %v588
        %v591 = vrsqrt.pop %v589
        %v592 = vmul.f32 %v572, %v590
        %v593 = vmul.f32 %v573, %v591
        %v594 = vlaneseq
        %v595 = vshrl.u32 %v594, 7
        %v596 = vsub.s32 1, %v595
        %v597 = vrot.slane %v472, %v596
        %v598 = vmul.f32 %v592, %v597
        %v599 = vmul.f32 %v593, %v597
        %v600 = vlaneseq
        %v601 = vshrl.u32 %v600, 7
        %v602 = vsub.s32 2, %v601
        %v603 = vrot.slane %v472, %v602
        %v604 = vadd.f32 %v598, %v603
        %v605 = vadd.f32 %v599, %v603
        %v606 = vxor.u32 %v604, 2147483648
        %v607 = vxor.u32 %v605, 2147483648
        %v608 = vmul.f32 %v606, 1.442695
        %v609 = vpow.pop %v608
        %v610 = vmul.f32 %v607, 1.442695
        %v611 = vpow.pop %v610
        %v612 = vadd.f32 %v609, 1.0
        %v613 = vadd.f32 %v611, 1.0
        %v614 = vrcp.pop %v612
        %v615 = vmul.f32 1.0, %v614
        %v616 = vrcp.pop %v613
        %v617 = vmul.f32 1.0, %v616
        %v618 = vmul.f32 %v604, %v615
        %v619 = vmul.f32 %v605, %v617
        %v620 = vpack.c.bf16 %v619, %v618
        %621 = vst [vmem:[#allocation3] sm:$0xff] %v620
        %v622 = vld [vmem:[#allocation3] sm:$0xff]
        %v623 = vld [vmem:[%s5] sm:$0xf]
        %v624 = vld [vmem:[%s5 + $0x4] sm:$0xf]
        %v625 = vld [vmem:[%s5 + $0x8] sm:$0xf]
        %v626 = vld [vmem:[%s5 + $0xc] sm:$0xf]
        %v627 = vld [vmem:[%s5 + $0x10] sm:$0xf]
        %v628 = vld [vmem:[%s5 + $0x14] sm:$0xf]
        %v629 = vld [vmem:[%s5 + $0x18] sm:$0xf]
        %v630 = vld [vmem:[%s5 + $0x1c] sm:$0xf]
        %v631 = vld [vmem:[%s5 + $0x20] sm:$0xf]
        %v632 = vld [vmem:[%s5 + $0x24] sm:$0xf]
        %v633 = vld [vmem:[%s5 + $0x28] sm:$0xf]
        %v634 = vld [vmem:[%s5 + $0x2c] sm:$0xf]
        %v635 = vld [vmem:[%s5 + $0x30] sm:$0xf]
        %v636 = vld [vmem:[%s5 + $0x34] sm:$0xf]
        %v637 = vld [vmem:[%s5 + $0x38] sm:$0xf]
        %v638 = vld [vmem:[%s5 + $0x3c] sm:$0xf]
        %v639 = vld [vmem:[%s6] sm:$0x7]
        %v640 = vlaneseq
        %v641 = vshrl.u32 %v640, 7
        %v642 = vsub.s32 0, %v641
        %v643 = vrot.slane %v639, %v642
        %v660 = vunpack.c.l.b16 %v623
        %v661 = vunpack.c.l.b16 %v624
        %v662 = vunpack.c.l.b16 %v625
        %v663 = vunpack.c.l.b16 %v626
        %v664 = vunpack.c.l.b16 %v627
        %v665 = vunpack.c.l.b16 %v628
        %v666 = vunpack.c.l.b16 %v629
        %v667 = vunpack.c.l.b16 %v630
        %v668 = vunpack.c.l.b16 %v631
        %v669 = vunpack.c.l.b16 %v632
        %v670 = vunpack.c.l.b16 %v633
        %v671 = vunpack.c.l.b16 %v634
        %v672 = vunpack.c.l.b16 %v635
        %v673 = vunpack.c.l.b16 %v636
        %v674 = vunpack.c.l.b16 %v637
        %v675 = vunpack.c.l.b16 %v638
        %v676 = vpack.c.b16 %v661, %v660
        %v677 = vpack.c.b16 %v663, %v662
        %v678 = vpack.c.b16 %v665, %v664
        %v679 = vpack.c.b16 %v667, %v666
        %v680 = vpack.c.b16 %v669, %v668
        %v681 = vpack.c.b16 %v671, %v670
        %v682 = vpack.c.b16 %v673, %v672
        %v683 = vpack.c.b16 %v675, %v674
        %692 = vmatprep.subr.bf16.mxu0 0
        %693 = vmatpush1.bf16.msra.mxu0 %v676
        %694 = vmatprep.subr.bf16.mxu0 0
        %695 = vmatpush1.bf16.msra.mxu0 %v677
        %696 = vmatprep.subr.bf16.mxu0 0
        %697 = vmatpush1.bf16.msra.mxu0 %v678
        %698 = vmatprep.subr.bf16.mxu0 0
        %699 = vmatpush1.bf16.msra.mxu0 %v679
        %700 = vmatprep.subr.bf16.mxu0 0
        %701 = vmatpush1.bf16.msra.mxu0 %v680
        %702 = vmatprep.subr.bf16.mxu0 0
        %703 = vmatpush1.bf16.msra.mxu0 %v681
        %704 = vmatprep.subr.bf16.mxu0 0
        %705 = vmatpush1.bf16.msra.mxu0 %v682
        %706 = vmatprep.subr.bf16.mxu0 0
        %707 = vmatpush1.bf16.msra.mxu0 %v683
        %708 = vmatprep.subr.bf16.mxu0 0
        %709 = vmatpush1.bf16.msra.mxu0 0
        %710 = vmatprep.subr.bf16.mxu0 0
        %711 = vmatpush1.bf16.msra.mxu0 0
        %712 = vmatprep.subr.bf16.mxu0 0
        %713 = vmatpush1.bf16.msra.mxu0 0
        %714 = vmatprep.subr.bf16.mxu0 0
        %715 = vmatpush1.bf16.msra.mxu0 0
        %716 = vmatprep.subr.bf16.mxu0 0
        %717 = vmatpush1.bf16.msra.mxu0 0
        %718 = vmatprep.subr.bf16.mxu0 0
        %719 = vmatpush1.bf16.msra.mxu0 0
        %720 = vmatprep.subr.bf16.mxu0 0
        %721 = vmatpush1.bf16.msra.mxu0 0
        %722 = vmatprep.subr.bf16.mxu0 0
        %723 = vmatpush1.bf16.msra.mxu0 0
        %724 = vmatprep.mubr.bf16.mxu0 0
        %725 = vmatmul.mubr.bf16.gmra.mrb[0].mxu0 %v622
        %v726 = vpop.f32.mrb[0].mxu0
        %v727 = vadd.f32 %v643, %v726
        %v728 = vpop.f32.mrb[0].mxu0
        %v729 = vpop.f32.mrb[0].mxu0
        %v730 = vadd.f32 %v643, %v729
        %v731 = vpop.f32.mrb[0].mxu0
        %732 = vdwg.mxu0
        %733 = vst [vmem:[%s272] sm:$0xff] %v727
        %734 = vst [vmem:[%s272 + $0x8] sm:$0xff] %v730
        %s735 = sand.u32 %s181, 1
        %s736 = scalar_lea.sflag [#allocation5], %s735
        %s737 = sand.u32 %s181, 1
        %s738 = smul.addr %s737, 16
        %s739 = scalar_lea.vmem [#allocation4], %s738
        // Predicated region
        $region49: #{pretrained_image_encoder_forward.1} parent=47 // pred_check
          %p740 = pneg %p191
        $region50: #{pretrained_image_encoder_forward.1} parent=47 // pred_check_branch
          %742 = sbr.rel (%p740) target = $region52
        $region51: #{pretrained_image_encoder_forward.1} parent=47 // pred_region
          %s743 = smul.u32 2, %s21
          %s745 = ssub.s32 256, 256
          %746 = vsyncadd %s736, %s745
          %s747 = smul.addr %s743, 128
          %s748 = scalar_lea.hbm %s7, %s747
          %s749 = sshll.u32 %s739, 4
          %s750 = int_to_ptr.vmem [resolvable:$true] %s749
          %755 = dma.vmem_to_hbm [thread:$0]  %s750, 256, %s748, %s736, 128, 128, 8
        $region52: #{pretrained_image_encoder_forward.1} parent=47 // pred_fallthru
          _
      $region48: #{pretrained_image_encoder_forward.1} parent=5 // pred_fallthru
        _
      %p756 = scmp.le.s32.totalorder 2, %s16
      // Predicated region
      $region53: #{pretrained_image_encoder_forward.1} parent=5 // pred_check
        %p757 = pneg %p756
      $region54: #{pretrained_image_encoder_forward.1} parent=5 // pred_check_branch
        %759 = sbr.rel (%p757) target = $region56
      $region55: #{pretrained_image_encoder_forward.1} parent=5 // pred_region
        %s760 = ssub.s32 %s16, 2
        // Predicated region
        $region57: #{pretrained_image_encoder_forward.1} parent=55 // pred_check
          %p761 = pneg %p197
        $region58: #{pretrained_image_encoder_forward.1} parent=55 // pred_check_branch
          %763 = sbr.rel (%p761) target = $region60
        $region59: #{pretrained_image_encoder_forward.1} parent=55 // pred_region
          %s764 = sand.u32 %s182, 1
          %s765 = scalar_lea.sflag [#allocation5], %s764
          %s766 = sand.u32 %s182, 1
          %s767 = smul.addr %s766, 16
          %s768 = scalar_lea.vmem [#allocation4], %s767
          %769 = dma.done %s765, 256
        $region60: #{pretrained_image_encoder_forward.1} parent=55 // pred_fallthru
          _
      $region56: #{pretrained_image_encoder_forward.1} parent=5 // pred_fallthru
        _
    $region6: #{pretrained_image_encoder_forward.1} parent=1 // loop_footer
      %s20 = sadd.s32 1, %s16
    $region7: #{pretrained_image_encoder_forward.1} parent=1 // loop_footer_branch
      %15 = sbr.rel target = $region3
    $region8: #{pretrained_image_encoder_forward.1} parent=1 // loop_exit
      _
    %770 = vsyncpa [#allocation5], 1
    %s771 = scalar_lea.sflag [#allocation5], 1
    %772 = vsyncpa %s771, 1

</llo_original>
